<compile_context>
chip_gen: v7x
topology: tpu7x:2x2x1
jax: 0.10.0
libtpu: 0.0.40
codegen_flags: <defaults>
</compile_context>

<pallas_src>
import functools

import jax
import jax.numpy as jnp
import numpy as np
from jax.experimental import pallas as pl
from jax.experimental.pallas import tpu as pltpu


# ---------------------------------------------------------------------------
# Pallas kernel: two MXU projections + tanh + v-reduction + softmax over tags
# ---------------------------------------------------------------------------
def attention_kernel(
    hidden_ref,   # (Bb, H)         bf16  decoder hidden state (batch block)
    tags_ref,     # (Bb*Tp, Ep)     bf16  tag embeddings, flattened/padded
    wh_ref,       # (H, H)          bf16  Linear weight rows acting on `hidden`
    wt_ref,       # (Ep, H)         bf16  Linear weight rows acting on tag embeds
    b_ref,        # (1, H)          f32   Linear bias
    v_ref,        # (1, H)          f32   attention vector v
    out_ref,      # (Bb, Tp)        f32   softmax attention weights
    *,
    n_tags_padded: int,
    n_tags_valid: int,
):
    Bb, H = hidden_ref.shape
    T = n_tags_padded

    # Split-weight form of Linear(cat(hidden, tags)): two lane-contiguous dots,
    # f32 accumulation on the MXU.
    pre_h = jnp.dot(hidden_ref[...], wh_ref[...],
                    preferred_element_type=jnp.float32)          # (Bb, H)
    pre_h = pre_h + b_ref[...]                                   # fold bias at (Bb, H)
    pre_t = jnp.dot(tags_ref[...], wt_ref[...],
                    preferred_element_type=jnp.float32)          # (Bb*T, H)
    pre_t = pre_t.reshape(Bb, T, H)                              # lane dim unchanged,
                                                                 # T multiple of 8 -> no copy

    # energy = tanh(W_h h + W_t tag + b)   (EUP tanh, f32 elementwise)
    energy = jnp.tanh(pre_t + pre_h[:, None, :])                 # (Bb, T, H)

    # scores_t = v . energy_t   (cross-lane reduce -> XLU slot)
    scores = jnp.sum(energy * v_ref[...][None, :, :], axis=-1)   # (Bb, T)

    # mask padded tag positions (only generated when T was padded)
    if n_tags_valid < n_tags_padded:
        col = jax.lax.broadcasted_iota(jnp.int32, (Bb, T), 1)
        scores = jnp.where(col < n_tags_valid, scores, -jnp.inf)

    # softmax over the tag axis (max-stabilized; EXACT divide so rows sum to 1)
    scores = scores - jnp.max(scores, axis=-1, keepdims=True)
    e = jnp.exp(scores)
    denom = jnp.sum(e, axis=-1, keepdims=True)
    out_ref[...] = e / denom


# ---------------------------------------------------------------------------
# Wrapper: dtype casts / padding / flattening (layout plumbing) + pallas_call
# ---------------------------------------------------------------------------
def attention_forward(params, hidden, tag_embeds, *, block_b=None):
    B, T, E = tag_embeds.shape
    H = hidden.shape[1]

    # lane/sublane alignment: E -> multiple of 128, T -> multiple of 8
    T_pad = ((T + 7) // 8) * 8
    E_pad = ((E + 127) // 128) * 128

    if block_b is None:
        if B > 128:
            # >=2 grid steps for dual-TC v7x, rows per MXU feed stay >=128
            block_b = 128
        else:
            block_b = B

    # bf16 MXU operands (wrapper-side cast halves HBM->VMEM DMA bytes);
    # bias / v / all elementwise math stay f32.
    hidden_b = hidden.astype(jnp.bfloat16)                       # (B, H)
    tags = tag_embeds
    if T_pad != T or E_pad != E:
        tags = jnp.pad(tags, ((0, 0), (0, T_pad - T), (0, E_pad - E)))
    tags_flat = tags.reshape(B * T_pad, E_pad).astype(jnp.bfloat16)  # (B*Tp, Ep)
    wh = params["w_h"].astype(jnp.bfloat16)                      # (H, H)
    wt = params["w_t"]
    if E_pad != E:
        wt = jnp.pad(wt, ((0, E_pad - E), (0, 0)))               # zero rows -> no effect
    wt = wt.astype(jnp.bfloat16)                                 # (Ep, H)
    b = params["b"].reshape(1, H).astype(jnp.float32)
    v = params["v"].reshape(1, H).astype(jnp.float32)

    kernel = functools.partial(
        attention_kernel, n_tags_padded=T_pad, n_tags_valid=T)

    out = pl.pallas_call(
        kernel,
        out_shape=jax.ShapeDtypeStruct((B, T_pad), jnp.float32),
        grid_spec=pltpu.PrefetchScalarGridSpec(
            num_scalar_prefetch=0,
            grid=(pl.cdiv(B, block_b),),
            in_specs=[
                pl.BlockSpec((block_b, H), lambda i: (i, 0)),          # hidden block
                pl.BlockSpec((block_b * T_pad, E_pad), lambda i: (i, 0)),  # tags block
                pl.BlockSpec((H, H), lambda i: (0, 0)),                # W_h (resident)
                pl.BlockSpec((E_pad, H), lambda i: (0, 0)),            # W_t (resident)
                pl.BlockSpec((1, H), lambda i: (0, 0)),                # bias
                pl.BlockSpec((1, H), lambda i: (0, 0)),                # v
            ],
            out_specs=pl.BlockSpec((block_b, T_pad), lambda i: (i, 0)),
        ),
        compiler_params=pltpu.CompilerParams(
            dimension_semantics=("parallel",)),                        # dual-TC on v7x
    )(hidden_b, tags_flat, wh, wt, b, v)

    if T_pad != T:
        out = out[:, :T]
    return out


# ---------------------------------------------------------------------------
# Pure-JAX reference mirroring the PyTorch module (concat form, f32)
# ---------------------------------------------------------------------------
def attention_reference(params, hidden, tag_embeds):
    B, T, E = tag_embeds.shape
    H = hidden.shape[1]
    # nn.Linear(dec_h + emb, dec_h) applied to cat((hidden_rep, tags), dim=2)
    w_full = jnp.concatenate([params["w_h"], params["w_t"]], axis=0)   # (H+E, H)
    hid_rep = jnp.broadcast_to(hidden[:, None, :], (B, T, H))
    x = jnp.concatenate([hid_rep, tag_embeds], axis=-1)                # (B, T, H+E)
    energy = jnp.tanh(x @ w_full + params["b"][None, None, :])         # (B, T, H)
    scores = jnp.einsum("bth,h->bt", energy, params["v"])              # bmm(v, energy^T)
    return jax.nn.softmax(scores, axis=-1)


# ---------------------------------------------------------------------------
# Parameter init (shapes per Attention.__init__, scaled down, PyTorch-style)
# ---------------------------------------------------------------------------
def init_params(key, *, emb_dim, dec_h_dim):
    ks = jax.random.split(key, 4)
    fan_in = dec_h_dim + emb_dim
    s = 1.0 / np.sqrt(fan_in)
    u = lambda k, shape: jax.random.uniform(k, shape, jnp.float32, -s, s)
    return {
        "w_h": u(ks[0], (dec_h_dim, dec_h_dim)),   # rows of attn.weight.T for hidden
        "w_t": u(ks[1], (emb_dim, dec_h_dim)),     # rows of attn.weight.T for tags
        "b":   u(ks[2], (dec_h_dim,)),
        "v":   jax.random.uniform(ks[3], (dec_h_dim,), jnp.float32, 0.0, 1.0),
    }


if __name__ == "__main__":
    # Small, lane-aligned shapes consistent with the module (scaled down from
    # emb_dim=200, dec_h_dim=512).
    B, T = 8, 8            # batch, number of tag positions
    EMB_DIM = 128          # tag embedding dim
    DEC_H = 128            # decoder hidden dim

    key = jax.random.PRNGKey(0)
    kp, k1, k2 = jax.random.split(key, 3)

    params = init_params(kp, emb_dim=EMB_DIM, dec_h_dim=DEC_H)
    hidden = jax.random.normal(k1, (B, DEC_H), jnp.float32)
    tag_embeds = jax.random.normal(k2, (B, T, EMB_DIM), jnp.float32)

    attn = attention_forward(params, hidden, tag_embeds)
    jax.block_until_ready(attn)

    ref = attention_reference(params, hidden, tag_embeds)
    # bf16 MXU operands -> relaxed tolerance vs. the f32 reference.
    np.testing.assert_allclose(np.asarray(attn), np.asarray(ref),
                               rtol=2e-2, atol=2e-2)
    # rows are a valid probability distribution (exact softmax divide)
    np.testing.assert_allclose(np.asarray(attn).sum(-1), np.ones(B),
                               rtol=1e-3, atol=1e-3)

    print("KERNEL_OK")
</pallas_src>

<mosaic_0001>
module attributes {stable_mosaic.version = 11 : i64} {
  func.func @attention_kernel(%arg0: i32, %arg1: memref<8x128xbf16, #tpu.memory_space<vmem>>, %arg2: memref<64x128xbf16, #tpu.memory_space<vmem>>, %arg3: memref<128x128xbf16, #tpu.memory_space<vmem>>, %arg4: memref<128x128xbf16, #tpu.memory_space<vmem>>, %arg5: memref<1x128xf32, #tpu.memory_space<vmem>>, %arg6: memref<1x128xf32, #tpu.memory_space<vmem>>, %arg7: memref<8x8xf32, #tpu.memory_space<vmem>>) attributes {dimension_semantics = [#tpu.dimension_semantics<parallel>], iteration_bounds = array<i64: 1>, scalar_prefetch = 0 : i64, scratch_operands = 0 : i64, tpu.core_type = #tpu.core_type<tc>, window_params = [{transform_indices = @transform_0, window_bounds = array<i64: 8, 128>}, {transform_indices = @transform_1, window_bounds = array<i64: 64, 128>}, {pipeline_mode = #tpu.pipeline_mode<synchronous>, transform_indices = @transform_2, window_bounds = array<i64: 128, 128>}, {pipeline_mode = #tpu.pipeline_mode<synchronous>, transform_indices = @transform_3, window_bounds = array<i64: 128, 128>}, {pipeline_mode = #tpu.pipeline_mode<synchronous>, transform_indices = @transform_4, window_bounds = array<i64: 1, 128>}, {pipeline_mode = #tpu.pipeline_mode<synchronous>, transform_indices = @transform_5, window_bounds = array<i64: 1, 128>}, {transform_indices = @transform_6, window_bounds = array<i64: 8, 8>}]} {
    %c0 = arith.constant 0 : index
    %c0_0 = arith.constant 0 : index
    %0 = vector.load %arg1[%c0, %c0_0] : memref<8x128xbf16, #tpu.memory_space<vmem>>, vector<8x128xbf16>
    %c0_1 = arith.constant 0 : index
    %c0_2 = arith.constant 0 : index
    %1 = vector.load %arg3[%c0_1, %c0_2] : memref<128x128xbf16, #tpu.memory_space<vmem>>, vector<128x128xbf16>
    %cst = arith.constant dense<0.000000e+00> : vector<8x128xf32>
    %2 = tpu.matmul %0, %1, %cst {dimension_numbers = #tpu.dot_dimension_numbers<[1], [0], [0], [1], [0, 0, 1, 1], [], []>} : vector<8x128xbf16>, vector<128x128xbf16>, vector<8x128xf32> -> vector<8x128xf32>
    %c0_3 = arith.constant 0 : index
    %c0_4 = arith.constant 0 : index
    %3 = vector.load %arg5[%c0_3, %c0_4] : memref<1x128xf32, #tpu.memory_space<vmem>>, vector<1x128xf32>
    %4 = vector.broadcast %3 : vector<1x128xf32> to vector<8x128xf32>
    %5 = arith.addf %2, %4 : vector<8x128xf32>
    %c0_5 = arith.constant 0 : index
    %c0_6 = arith.constant 0 : index
    %6 = vector.load %arg2[%c0_5, %c0_6] : memref<64x128xbf16, #tpu.memory_space<vmem>>, vector<64x128xbf16>
    %c0_7 = arith.constant 0 : index
    %c0_8 = arith.constant 0 : index
    %7 = vector.load %arg4[%c0_7, %c0_8] : memref<128x128xbf16, #tpu.memory_space<vmem>>, vector<128x128xbf16>
    %cst_9 = arith.constant dense<0.000000e+00> : vector<64x128xf32>
    %8 = tpu.matmul %6, %7, %cst_9 {dimension_numbers = #tpu.dot_dimension_numbers<[1], [0], [0], [1], [0, 0, 1, 1], [], []>} : vector<64x128xbf16>, vector<128x128xbf16>, vector<64x128xf32> -> vector<64x128xf32>
    %9 = vector.shape_cast %8 : vector<64x128xf32> to vector<8x8x128xf32>
    %10 = vector.shape_cast %5 : vector<8x128xf32> to vector<8x1x128xf32>
    %11 = vector.broadcast %10 : vector<8x1x128xf32> to vector<8x8x128xf32>
    %12 = arith.addf %9, %11 : vector<8x8x128xf32>
    %13 = math.tanh %12 : vector<8x8x128xf32>
    %c0_10 = arith.constant 0 : index
    %c0_11 = arith.constant 0 : index
    %14 = vector.load %arg6[%c0_10, %c0_11] : memref<1x128xf32, #tpu.memory_space<vmem>>, vector<1x128xf32>
    %15 = vector.shape_cast %14 : vector<1x128xf32> to vector<1x1x128xf32>
    %16 = vector.broadcast %15 : vector<1x1x128xf32> to vector<8x8x128xf32>
    %17 = arith.mulf %13, %16 : vector<8x8x128xf32>
    %cst_12 = arith.constant dense<0.000000e+00> : vector<8x8xf32>
    %18 = vector.multi_reduction <add>, %17, %cst_12 [2] : vector<8x8x128xf32> to vector<8x8xf32>
    %cst_13 = arith.constant dense<0xFF800000> : vector<8xf32>
    %19 = vector.multi_reduction <maximumf>, %18, %cst_13 [1] : vector<8x8xf32> to vector<8xf32>
    %20 = vector.shape_cast %19 : vector<8xf32> to vector<8x1xf32>
    %21 = vector.broadcast %20 : vector<8x1xf32> to vector<8x8xf32>
    %22 = arith.subf %18, %21 : vector<8x8xf32>
    %23 = math.exp %22 : vector<8x8xf32>
    %cst_14 = arith.constant dense<0.000000e+00> : vector<8xf32>
    %24 = vector.multi_reduction <add>, %23, %cst_14 [1] : vector<8x8xf32> to vector<8xf32>
    %25 = vector.shape_cast %24 : vector<8xf32> to vector<8x1xf32>
    %26 = vector.broadcast %25 : vector<8x1xf32> to vector<8x8xf32>
    %27 = arith.divf %23, %26 : vector<8x8xf32>
    %c0_15 = arith.constant 0 : index
    %c0_16 = arith.constant 0 : index
    %28 = vector.load %arg7[%c0_15, %c0_16] : memref<8x8xf32, #tpu.memory_space<vmem>>, vector<8x8xf32>
    tpu.vector_store %arg7[%c0_15, %c0_16], %27 {strides = array<i32>} : memref<8x8xf32, #tpu.memory_space<vmem>>, vector<8x8xf32>,
    return
  }
  func.func @transform_0(%arg0: i32) -> (i32, i32) {
    %c0_i32 = arith.constant 0 : i32
    %c0_i32_0 = arith.constant 0 : i32
    return %arg0, %c0_i32 : i32, i32
  }
  func.func @transform_1(%arg0: i32) -> (i32, i32) {
    %c0_i32 = arith.constant 0 : i32
    %c0_i32_0 = arith.constant 0 : i32
    return %arg0, %c0_i32 : i32, i32
  }
  func.func @transform_2(%arg0: i32) -> (i32, i32) {
    %c0_i32 = arith.constant 0 : i32
    %c0_i32_0 = arith.constant 0 : i32
    %c0_i32_1 = arith.constant 0 : i32
    return %c0_i32, %c0_i32_0 : i32, i32
  }
  func.func @transform_3(%arg0: i32) -> (i32, i32) {
    %c0_i32 = arith.constant 0 : i32
    %c0_i32_0 = arith.constant 0 : i32
    %c0_i32_1 = arith.constant 0 : i32
    return %c0_i32, %c0_i32_0 : i32, i32
  }
  func.func @transform_4(%arg0: i32) -> (i32, i32) {
    %c0_i32 = arith.constant 0 : i32
    %c0_i32_0 = arith.constant 0 : i32
    %c0_i32_1 = arith.constant 0 : i32
    return %c0_i32, %c0_i32_0 : i32, i32
  }
  func.func @transform_5(%arg0: i32) -> (i32, i32) {
    %c0_i32 = arith.constant 0 : i32
    %c0_i32_0 = arith.constant 0 : i32
    %c0_i32_1 = arith.constant 0 : i32
    return %c0_i32, %c0_i32_0 : i32, i32
  }
  func.func @transform_6(%arg0: i32) -> (i32, i32) {
    %c0_i32 = arith.constant 0 : i32
    %c0_i32_0 = arith.constant 0 : i32
    return %arg0, %c0_i32 : i32, i32
  }
}

</mosaic_0001>

<llo_original>
// kernel: tpu_custom_call.1
$region0: #{tpu_custom_call.1}
  #allocation0 [shape = 'u32[]', space=smem, size = 0x4, offset = 0x4, fixed_abs, tag = 'smem constant byte address 0x4 - core index']
  #allocation1 [shape = 'u32[144,128]{1,0:T(1,128)}', space=vmem, size = 0x12000, scoped, tag = 'internal scratch']
  %s0 = inlined_call_operand.hbm [shape: bf16[8,128], index: 0, kind: input, shape index: {}]
  %s1 = inlined_call_operand.hbm [shape: bf16[64,128], index: 1, kind: input, shape index: {}]
  %s2 = inlined_call_operand.hbm [shape: bf16[128,128], index: 2, kind: input, shape index: {}]
  %s3 = inlined_call_operand.hbm [shape: bf16[128,128], index: 3, kind: input, shape index: {}]
  %s4 = inlined_call_operand.vmem [shape: f32[1,128], index: 4, kind: input, shape index: {}]
  %s5 = inlined_call_operand.vmem [shape: f32[1,128], index: 5, kind: input, shape index: {}]
  %s6 = inlined_call_operand.hbm [shape: f32[8,8], index: 6, kind: output, shape index: {}]
  %s7 = sld [smem:[#allocation0]]
  $region50: #{tpu_custom_call.1} parent=0
    _
  %s9 = ssub.s32 1, %s7
  %s10 = scalar_select 0, %s9, %s7
  $region1: #{tpu_custom_call.1} parent=0
    #allocation2 [shape = 'u8[2048]{0}', space=vmem, size = 0x800, scoped, tag = 'input window, operand 0, single buffered']
    #allocation3 [shape = 's32[1]{0}', space=sflag, size = 0x4, scoped, tag = 'scoped memory for tpu_custom_call.1']
    #allocation4 [shape = 's32[1]{0}', space=sflag, size = 0x4, scoped, tag = 'scoped memory for tpu_custom_call.1']
    #allocation5 [shape = 'u8[16384]{0}', space=vmem, size = 0x4000, scoped, tag = 'input window, operand 1, single buffered']
    #allocation6 [shape = 's32[1]{0}', space=sflag, size = 0x4, scoped, tag = 'scoped memory for tpu_custom_call.1']
    #allocation7 [shape = 'u8[32768]{0}', space=vmem, size = 0x8000, scoped, tag = 'input window, operand 2, single buffered']
    #allocation8 [shape = 'u8[32768]{0}', space=vmem, size = 0x8000, scoped, tag = 'input window, operand 3, single buffered']
    #allocation9 [shape = 's32[1]{0}', space=sflag, size = 0x4, scoped, tag = 'scoped memory for tpu_custom_call.1']
    #allocation10 [shape = 'u8[4096]{0}', space=vmem, size = 0x1000, scoped, tag = 'output window, operand 0, single buffered']
    %11 = vsyncpa [#allocation3], 0
    %12 = vsyncpa [#allocation6], 0
    %13 = vsyncpa [#allocation9], 0
    %14 = vsyncpa [#allocation4], 0
    // Predicated region
    $region2: #{tpu_custom_call.1} parent=1 // pred_check
      _
    $region3: #{tpu_custom_call.1} parent=1 // pred_check_branch
      %16 = sbr.rel (0) target = $region5
    $region4: #{tpu_custom_call.1} parent=1 // pred_region
      %s18 = ssub.s32 64, 64
      %19 = vsyncadd [#allocation3], %s18
      %s21 = sshll.u32 [#allocation2], 4
      %s22 = int_to_ptr.vmem [resolvable:$true] %s21
      %24 = dma.hbm_to_vmem [thread:$0]  %s0, 64, %s22, [#allocation3]
    $region5: #{tpu_custom_call.1} parent=1 // pred_fallthru
      _
    // Predicated region
    $region6: #{tpu_custom_call.1} parent=1 // pred_check
      _
    $region7: #{tpu_custom_call.1} parent=1 // pred_check_branch
      %26 = sbr.rel (0) target = $region9
    $region8: #{tpu_custom_call.1} parent=1 // pred_region
      %s28 = ssub.s32 512, 512
      %29 = vsyncadd [#allocation6], %s28
      %s30 = sshll.u32 [#allocation5], 4
      %s31 = int_to_ptr.vmem [resolvable:$true] %s30
      %36 = dma.hbm_to_vmem [thread:$0]  %s1, 512, %s31, [#allocation6], 64, 64, 4
    $region9: #{tpu_custom_call.1} parent=1 // pred_fallthru
      _
    // Predicated region
    $region10: #{tpu_custom_call.1} parent=1 // pred_check
      _
    $region11: #{tpu_custom_call.1} parent=1 // pred_check_branch
      %38 = sbr.rel (0) target = $region13
    $region12: #{tpu_custom_call.1} parent=1 // pred_region
      %s40 = ssub.s32 1024, 1024
      %41 = vsyncadd [#allocation6], %s40
      %s42 = sshll.u32 [#allocation7], 4
      %s43 = int_to_ptr.vmem [resolvable:$true] %s42
      %48 = dma.hbm_to_vmem [thread:$0]  %s2, 1024, %s43, [#allocation6], 64, 64, 4
    $region13: #{tpu_custom_call.1} parent=1 // pred_fallthru
      _
    // Predicated region
    $region14: #{tpu_custom_call.1} parent=1 // pred_check
      _
    $region15: #{tpu_custom_call.1} parent=1 // pred_check_branch
      %50 = sbr.rel (0) target = $region17
    $region16: #{tpu_custom_call.1} parent=1 // pred_region
      %s52 = ssub.s32 1024, 1024
      %53 = vsyncadd [#allocation9], %s52
      %s54 = sshll.u32 [#allocation8], 4
      %s55 = int_to_ptr.vmem [resolvable:$true] %s54
      %60 = dma.hbm_to_vmem [thread:$0]  %s3, 1024, %s55, [#allocation9], 64, 64, 4
    $region17: #{tpu_custom_call.1} parent=1 // pred_fallthru
      _
    // Predicated region
    $region18: #{tpu_custom_call.1} parent=1 // pred_check
      _
    $region19: #{tpu_custom_call.1} parent=1 // pred_check_branch
      %62 = sbr.rel (0) target = $region21
    $region20: #{tpu_custom_call.1} parent=1 // pred_region
      _
    $region21: #{tpu_custom_call.1} parent=1 // pred_fallthru
      _
    // Predicated region
    $region22: #{tpu_custom_call.1} parent=1 // pred_check
      _
    $region23: #{tpu_custom_call.1} parent=1 // pred_check_branch
      %64 = sbr.rel (0) target = $region25
    $region24: #{tpu_custom_call.1} parent=1 // pred_region
      _
    $region25: #{tpu_custom_call.1} parent=1 // pred_fallthru
      _
    // Predicated region
    $region26: #{tpu_custom_call.1} parent=1 // pred_check
      _
    $region27: #{tpu_custom_call.1} parent=1 // pred_check_branch
      %66 = sbr.rel (0) target = $region29
    $region28: #{tpu_custom_call.1} parent=1 // pred_region
      %67 = dma.done [#allocation3], 64
    $region29: #{tpu_custom_call.1} parent=1 // pred_fallthru
      _
    // Predicated region
    $region30: #{tpu_custom_call.1} parent=1 // pred_check
      _
    $region31: #{tpu_custom_call.1} parent=1 // pred_check_branch
      %69 = sbr.rel (0) target = $region33
    $region32: #{tpu_custom_call.1} parent=1 // pred_region
      %70 = dma.done [#allocation6], 512
    $region33: #{tpu_custom_call.1} parent=1 // pred_fallthru
      _
    // Predicated region
    $region34: #{tpu_custom_call.1} parent=1 // pred_check
      _
    $region35: #{tpu_custom_call.1} parent=1 // pred_check_branch
      %72 = sbr.rel (0) target = $region37
    $region36: #{tpu_custom_call.1} parent=1 // pred_region
      %73 = dma.done [#allocation6], 1024
    $region37: #{tpu_custom_call.1} parent=1 // pred_fallthru
      _
    // Predicated region
    $region38: #{tpu_custom_call.1} parent=1 // pred_check
      _
    $region39: #{tpu_custom_call.1} parent=1 // pred_check_branch
      %75 = sbr.rel (0) target = $region41
    $region40: #{tpu_custom_call.1} parent=1 // pred_region
      %76 = dma.done [#allocation9], 1024
    $region41: #{tpu_custom_call.1} parent=1 // pred_fallthru
      _
    %v78 = vld [vmem:[#allocation2] sm:$0xf]
    %v79 = vld [vmem:[#allocation7] sm:$0xf]
    %v80 = vld [vmem:[#allocation7 + $0x4] sm:$0xf]
    %v81 = vld [vmem:[#allocation7 + $0x8] sm:$0xf]
    %v82 = vld [vmem:[#allocation7 + $0xc] sm:$0xf]
    %v83 = vld [vmem:[#allocation7 + $0x10] sm:$0xf]
    %v84 = vld [vmem:[#allocation7 + $0x14] sm:$0xf]
    %v85 = vld [vmem:[#allocation7 + $0x18] sm:$0xf]
    %v86 = vld [vmem:[#allocation7 + $0x1c] sm:$0xf]
    %v87 = vld [vmem:[#allocation7 + $0x20] sm:$0xf]
    %v88 = vld [vmem:[#allocation7 + $0x24] sm:$0xf]
    %v89 = vld [vmem:[#allocation7 + $0x28] sm:$0xf]
    %v90 = vld [vmem:[#allocation7 + $0x2c] sm:$0xf]
    %v91 = vld [vmem:[#allocation7 + $0x30] sm:$0xf]
    %v92 = vld [vmem:[#allocation7 + $0x34] sm:$0xf]
    %v93 = vld [vmem:[#allocation7 + $0x38] sm:$0xf]
    %v94 = vld [vmem:[#allocation7 + $0x3c] sm:$0xf]
    %v95 = vld [vmem:[%s4] sm:$0x1]
    %v97 = vlaneseq
    %v98 = vshrl.u32 %v97, 7
    %v99 = vsub.s32 0, %v98
    %v100 = vrot.slane %v95, %v99
    %v118 = vunpack.c.l.b16 %v79
    %v119 = vunpack.c.l.b16 %v80
    %v120 = vunpack.c.l.b16 %v81
    %v121 = vunpack.c.l.b16 %v82
    %v122 = vunpack.c.l.b16 %v83
    %v123 = vunpack.c.l.b16 %v84
    %v124 = vunpack.c.l.b16 %v85
    %v125 = vunpack.c.l.b16 %v86
    %v126 = vunpack.c.l.b16 %v87
    %v127 = vunpack.c.l.b16 %v88
    %v128 = vunpack.c.l.b16 %v89
    %v129 = vunpack.c.l.b16 %v90
    %v130 = vunpack.c.l.b16 %v91
    %v131 = vunpack.c.l.b16 %v92
    %v132 = vunpack.c.l.b16 %v93
    %v133 = vunpack.c.l.b16 %v94
    %v134 = vpack.c.b16 %v119, %v118
    %v135 = vpack.c.b16 %v121, %v120
    %v136 = vpack.c.b16 %v123, %v122
    %v137 = vpack.c.b16 %v125, %v124
    %v138 = vpack.c.b16 %v127, %v126
    %v139 = vpack.c.b16 %v129, %v128
    %v140 = vpack.c.b16 %v131, %v130
    %v141 = vpack.c.b16 %v133, %v132
    %150 = vmatprep.subr.bf16.mxu0 0
    %151 = vmatpush1.bf16.msra.mxu0 %v134
    %152 = vmatprep.subr.bf16.mxu0 0
    %153 = vmatpush1.bf16.msra.mxu0 %v135
    %154 = vmatprep.subr.bf16.mxu0 0
    %155 = vmatpush1.bf16.msra.mxu0 %v136
    %156 = vmatprep.subr.bf16.mxu0 0
    %157 = vmatpush1.bf16.msra.mxu0 %v137
    %158 = vmatprep.subr.bf16.mxu0 0
    %159 = vmatpush1.bf16.msra.mxu0 %v138
    %160 = vmatprep.subr.bf16.mxu0 0
    %161 = vmatpush1.bf16.msra.mxu0 %v139
    %162 = vmatprep.subr.bf16.mxu0 0
    %163 = vmatpush1.bf16.msra.mxu0 %v140
    %164 = vmatprep.subr.bf16.mxu0 0
    %165 = vmatpush1.bf16.msra.mxu0 %v141
    %166 = vmatprep.subr.bf16.mxu0 0
    %167 = vmatpush1.bf16.msra.mxu0 0
    %168 = vmatprep.subr.bf16.mxu0 0
    %169 = vmatpush1.bf16.msra.mxu0 0
    %170 = vmatprep.subr.bf16.mxu0 0
    %171 = vmatpush1.bf16.msra.mxu0 0
    %172 = vmatprep.subr.bf16.mxu0 0
    %173 = vmatpush1.bf16.msra.mxu0 0
    %174 = vmatprep.subr.bf16.mxu0 0
    %175 = vmatpush1.bf16.msra.mxu0 0
    %176 = vmatprep.subr.bf16.mxu0 0
    %177 = vmatpush1.bf16.msra.mxu0 0
    %178 = vmatprep.subr.bf16.mxu0 0
    %179 = vmatpush1.bf16.msra.mxu0 0
    %180 = vmatprep.subr.bf16.mxu0 0
    %181 = vmatpush1.bf16.msra.mxu0 0
    %182 = vmatprep.mubr.bf16.mxu0 0
    %183 = vmatmul.mubr.bf16.gmra.mrb[0].mxu0 %v78
    %v184 = vpop.f32.mrb[0].mxu0
    %v185 = vadd.f32 %v100, %v184
    %v186 = vpop.f32.mrb[0].mxu0
    %v187 = vpop.f32.mrb[0].mxu0
    %v188 = vpop.f32.mrb[0].mxu0
    %189 = vdwg.mxu0
    %v190 = vld [vmem:[#allocation5] sm:$0xf]
    %v191 = vld [vmem:[#allocation5 + $0x4] sm:$0xf]
    %v192 = vld [vmem:[#allocation5 + $0x8] sm:$0xf]
    %v193 = vld [vmem:[#allocation5 + $0xc] sm:$0xf]
    %v194 = vld [vmem:[#allocation5 + $0x10] sm:$0xf]
    %v195 = vld [vmem:[#allocation5 + $0x14] sm:$0xf]
    %v196 = vld [vmem:[#allocation5 + $0x18] sm:$0xf]
    %v197 = vld [vmem:[#allocation5 + $0x1c] sm:$0xf]
    %v198 = vld [vmem:[#allocation8] sm:$0xf]
    %v199 = vld [vmem:[#allocation8 + $0x4] sm:$0xf]
    %v200 = vld [vmem:[#allocation8 + $0x8] sm:$0xf]
    %v201 = vld [vmem:[#allocation8 + $0xc] sm:$0xf]
    %v202 = vld [vmem:[#allocation8 + $0x10] sm:$0xf]
    %v203 = vld [vmem:[#allocation8 + $0x14] sm:$0xf]
    %v204 = vld [vmem:[#allocation8 + $0x18] sm:$0xf]
    %v205 = vld [vmem:[#allocation8 + $0x1c] sm:$0xf]
    %v206 = vld [vmem:[#allocation8 + $0x20] sm:$0xf]
    %v207 = vld [vmem:[#allocation8 + $0x24] sm:$0xf]
    %v208 = vld [vmem:[#allocation8 + $0x28] sm:$0xf]
    %v209 = vld [vmem:[#allocation8 + $0x2c] sm:$0xf]
    %v210 = vld [vmem:[#allocation8 + $0x30] sm:$0xf]
    %v211 = vld [vmem:[#allocation8 + $0x34] sm:$0xf]
    %v212 = vld [vmem:[#allocation8 + $0x38] sm:$0xf]
    %v213 = vld [vmem:[#allocation8 + $0x3c] sm:$0xf]
    %v222 = vunpack.c.l.b16 %v190
    %v223 = vunpack.c.l.b16 %v191
    %v224 = vunpack.c.l.b16 %v192
    %v225 = vunpack.c.l.b16 %v193
    %v226 = vunpack.c.l.b16 %v194
    %v227 = vunpack.c.l.b16 %v195
    %v228 = vunpack.c.l.b16 %v196
    %v229 = vunpack.c.l.b16 %v197
    %v230 = vpack.c.b16 %v223, %v222
    %v231 = vpack.c.b16 %v225, %v224
    %v232 = vpack.c.b16 %v227, %v226
    %v233 = vpack.c.b16 %v229, %v228
    %v254 = vunpack.c.l.b16 %v198
    %v255 = vunpack.c.l.b16 %v199
    %v256 = vunpack.c.l.b16 %v200
    %v257 = vunpack.c.l.b16 %v201
    %v258 = vunpack.c.l.b16 %v202
    %v259 = vunpack.c.l.b16 %v203
    %v260 = vunpack.c.l.b16 %v204
    %v261 = vunpack.c.l.b16 %v205
    %v262 = vunpack.c.l.b16 %v206
    %v263 = vunpack.c.l.b16 %v207
    %v264 = vunpack.c.l.b16 %v208
    %v265 = vunpack.c.l.b16 %v209
    %v266 = vunpack.c.l.b16 %v210
    %v267 = vunpack.c.l.b16 %v211
    %v268 = vunpack.c.l.b16 %v212
    %v269 = vunpack.c.l.b16 %v213
    %v270 = vpack.c.b16 %v255, %v254
    %v271 = vpack.c.b16 %v257, %v256
    %v272 = vpack.c.b16 %v259, %v258
    %v273 = vpack.c.b16 %v261, %v260
    %v274 = vpack.c.b16 %v263, %v262
    %v275 = vpack.c.b16 %v265, %v264
    %v276 = vpack.c.b16 %v267, %v266
    %v277 = vpack.c.b16 %v269, %v268
    %286 = vmatprep.subr.bf16.mxu0 0
    %287 = vmatpush1.bf16.msra.mxu0 %v270
    %288 = vmatprep.subr.bf16.mxu0 0
    %289 = vmatpush1.bf16.msra.mxu0 %v271
    %290 = vmatprep.subr.bf16.mxu0 0
    %291 = vmatpush1.bf16.msra.mxu0 %v272
    %292 = vmatprep.subr.bf16.mxu0 0
    %293 = vmatpush1.bf16.msra.mxu0 %v273
    %294 = vmatprep.subr.bf16.mxu0 0
    %295 = vmatpush1.bf16.msra.mxu0 %v274
    %296 = vmatprep.subr.bf16.mxu0 0
    %297 = vmatpush1.bf16.msra.mxu0 %v275
    %298 = vmatprep.subr.bf16.mxu0 0
    %299 = vmatpush1.bf16.msra.mxu0 %v276
    %300 = vmatprep.subr.bf16.mxu0 0
    %301 = vmatpush1.bf16.msra.mxu0 %v277
    %302 = vmatprep.subr.bf16.mxu0 0
    %303 = vmatpush1.bf16.msra.mxu0 0
    %304 = vmatprep.subr.bf16.mxu0 0
    %305 = vmatpush1.bf16.msra.mxu0 0
    %306 = vmatprep.subr.bf16.mxu0 0
    %307 = vmatpush1.bf16.msra.mxu0 0
    %308 = vmatprep.subr.bf16.mxu0 0
    %309 = vmatpush1.bf16.msra.mxu0 0
    %310 = vmatprep.subr.bf16.mxu0 0
    %311 = vmatpush1.bf16.msra.mxu0 0
    %312 = vmatprep.subr.bf16.mxu0 0
    %313 = vmatpush1.bf16.msra.mxu0 0
    %314 = vmatprep.subr.bf16.mxu0 0
    %315 = vmatpush1.bf16.msra.mxu0 0
    %316 = vmatprep.subr.bf16.mxu0 0
    %317 = vmatpush1.bf16.msra.mxu0 0
    %318 = vmatprep.mubr.bf16.mxu0 0
    %319 = vmatmul.mubr.bf16.gmra.mrb[0].mxu0 %v230
    %v320 = vpop.f32.mrb[0].mxu0
    %v321 = vadd.f32 0.0, %v320
    %v322 = vpop.f32.mrb[0].mxu0
    %v323 = vpop.f32.mrb[0].mxu0
    %v324 = vadd.f32 0.0, %v323
    %v325 = vpop.f32.mrb[0].mxu0
    %326 = vmatprep.mubr.bf16.mxu0 0
    %327 = vmatmul.mubr.bf16.gmra.mrb[0].mxu0 %v231
    %v328 = vpop.f32.mrb[0].mxu0
    %v329 = vadd.f32 0.0, %v328
    %v330 = vpop.f32.mrb[0].mxu0
    %v331 = vpop.f32.mrb[0].mxu0
    %v332 = vadd.f32 0.0, %v331
    %v333 = vpop.f32.mrb[0].mxu0
    %334 = vmatprep.mubr.bf16.mxu0 0
    %335 = vmatmul.mubr.bf16.gmra.mrb[0].mxu0 %v232
    %v336 = vpop.f32.mrb[0].mxu0
    %v337 = vadd.f32 0.0, %v336
    %v338 = vpop.f32.mrb[0].mxu0
    %v339 = vpop.f32.mrb[0].mxu0
    %v340 = vadd.f32 0.0, %v339
    %v341 = vpop.f32.mrb[0].mxu0
    %342 = vmatprep.mubr.bf16.mxu0 0
    %343 = vmatmul.mubr.bf16.gmra.mrb[0].mxu0 %v233
    %v344 = vpop.f32.mrb[0].mxu0
    %v345 = vadd.f32 0.0, %v344
    %v346 = vpop.f32.mrb[0].mxu0
    %v347 = vpop.f32.mrb[0].mxu0
    %v348 = vadd.f32 0.0, %v347
    %v349 = vpop.f32.mrb[0].mxu0
    %350 = vdwg.mxu0
    %v352 = vcombine.high %v185, %v185
    %v354 = vunpack.c.l.s4 1966171168
    %v355 = vunpack.c.0.s8 %v354
    %v356 = vlaneseq
    %v357 = vshrl.u32 %v356, 7
    %v358 = vsub.s32 %v355, %v357
    %v359 = vrot.slane %v185, %v358
    %v361 = vunpack.c.l.s4 1966171168
    %v362 = vunpack.c.0.s8 %v361
    %v363 = vlaneseq
    %v364 = vshrl.u32 %v363, 7
    %v365 = vsub.s32 %v362, %v364
    %v366 = vrot.slane %v352, %v365
    %v367 = vcombine.high %v359, %v359
    %v368 = vcombine.high %v366, %v366
    %v370 = vunpack.c.l.s4 1966171168
    %v371 = vunpack.c.0.s8 %v370
    %v372 = vlaneseq
    %v373 = vshrl.u32 %v372, 7
    %v374 = vsub.s32 %v371, %v373
    %v375 = vrot.slane %v359, %v374
    %v377 = vunpack.c.l.s4 1966171168
    %v378 = vunpack.c.0.s8 %v377
    %v379 = vlaneseq
    %v380 = vshrl.u32 %v379, 7
    %v381 = vsub.s32 %v378, %v380
    %v382 = vrot.slane %v366, %v381
    %v384 = vunpack.c.l.s4 1966171168
    %v385 = vunpack.c.0.s8 %v384
    %v386 = vlaneseq
    %v387 = vshrl.u32 %v386, 7
    %v388 = vsub.s32 %v385, %v387
    %v389 = vrot.slane %v367, %v388
    %v391 = vunpack.c.l.s4 1966171168
    %v392 = vunpack.c.0.s8 %v391
    %v393 = vlaneseq
    %v394 = vshrl.u32 %v393, 7
    %v395 = vsub.s32 %v392, %v394
    %v396 = vrot.slane %v368, %v395
    %v397 = vcombine.high %v375, %v375
    %v398 = vcombine.high %v382, %v382
    %v399 = vcombine.high %v389, %v389
    %v400 = vcombine.high %v396, %v396
    %v401 = vlaneseq
    %v402 = vshrl.u32 %v401, 7
    %v403 = vsub.s32 0, %v402
    %v404 = vrot.slane %v375, %v403
    %v405 = vlaneseq
    %v406 = vshrl.u32 %v405, 7
    %v407 = vsub.s32 0, %v406
    %v408 = vrot.slane %v389, %v407
    %v409 = vlaneseq
    %v410 = vshrl.u32 %v409, 7
    %v411 = vsub.s32 0, %v410
    %v412 = vrot.slane %v397, %v411
    %v413 = vlaneseq
    %v414 = vshrl.u32 %v413, 7
    %v415 = vsub.s32 0, %v414
    %v416 = vrot.slane %v399, %v415
    %v417 = vlaneseq
    %v418 = vshrl.u32 %v417, 7
    %v419 = vsub.s32 0, %v418
    %v420 = vrot.slane %v382, %v419
    %v421 = vlaneseq
    %v422 = vshrl.u32 %v421, 7
    %v423 = vsub.s32 0, %v422
    %v424 = vrot.slane %v396, %v423
    %v425 = vlaneseq
    %v426 = vshrl.u32 %v425, 7
    %v427 = vsub.s32 0, %v426
    %v428 = vrot.slane %v398, %v427
    %v429 = vlaneseq
    %v430 = vshrl.u32 %v429, 7
    %v431 = vsub.s32 0, %v430
    %v432 = vrot.slane %v400, %v431
    %v441 = vadd.f32 %v321, %v404
    %v442 = vadd.f32 %v324, %v408
    %v443 = vadd.f32 %v329, %v412
    %v444 = vadd.f32 %v332, %v416
    %v445 = vadd.f32 %v337, %v420
    %v446 = vadd.f32 %v340, %v424
    %v447 = vadd.f32 %v345, %v428
    %v448 = vadd.f32 %v348, %v432
    %v449 = vtanh.pop %v441
    %v450 = vtanh.pop %v442
    %v451 = vtanh.pop %v443
    %v452 = vtanh.pop %v444
    %v453 = vtanh.pop %v445
    %v454 = vtanh.pop %v446
    %v455 = vtanh.pop %v447
    %v456 = vtanh.pop %v448
    %v457 = vld [vmem:[%s5] sm:$0x1]
    %v459 = vlaneseq
    %v460 = vshrl.u32 %v459, 7
    %v461 = vsub.s32 0, %v460
    %v462 = vrot.slane %v457, %v461
    %v464 = vmul.f32 %v449, %v462
    %v465 = vmul.f32 %v450, %v462
    %v466 = vmul.f32 %v451, %v462
    %v467 = vmul.f32 %v452, %v462
    %v468 = vmul.f32 %v453, %v462
    %v469 = vmul.f32 %v454, %v462
    %v470 = vmul.f32 %v455, %v462
    %v471 = vmul.f32 %v456, %v462
    %472 = vadd.xlane.f32.xlu0 %v464
    %v473 = vpop.xlane.xlu0 %472
    %474 = vadd.xlane.f32.xlu0 %v465
    %v475 = vpop.xlane.xlu0 %474
    %476 = vadd.xlane.f32.xlu0 %v466
    %v477 = vpop.xlane.xlu0 %476
    %478 = vadd.xlane.f32.xlu0 %v467
    %v479 = vpop.xlane.xlu0 %478
    %480 = vadd.xlane.f32.xlu0 %v468
    %v481 = vpop.xlane.xlu0 %480
    %482 = vadd.xlane.f32.xlu0 %v469
    %v483 = vpop.xlane.xlu0 %482
    %484 = vadd.xlane.f32.xlu0 %v470
    %v485 = vpop.xlane.xlu0 %484
    %486 = vadd.xlane.f32.xlu0 %v471
    %v487 = vpop.xlane.xlu0 %486
    %v496 = vlaneseq
    %v497 = vand.u32 %v496, 127
    %v498 = vlaneseq
    %v499 = vshrl.u32 %v498, 7
    %v500 = vsub.s32 %v497, %v499
    %v501 = vrot.slane %v473, %v500
    %v502 = vlaneseq
    %v503 = vshrl.u32 %v502, 7
    %v504 = vsub.s32 %v497, %v503
    %v505 = vrot.slane %v475, %v504
    %v506 = vlaneseq
    %v507 = vshrl.u32 %v506, 7
    %v508 = vsub.s32 %v497, %v507
    %v509 = vrot.slane %v477, %v508
    %v510 = vlaneseq
    %v511 = vshrl.u32 %v510, 7
    %v512 = vsub.s32 %v497, %v511
    %v513 = vrot.slane %v479, %v512
    %v514 = vlaneseq
    %v515 = vshrl.u32 %v514, 7
    %v516 = vsub.s32 %v497, %v515
    %v517 = vrot.slane %v481, %v516
    %v518 = vlaneseq
    %v519 = vshrl.u32 %v518, 7
    %v520 = vsub.s32 %v497, %v519
    %v521 = vrot.slane %v483, %v520
    %v522 = vlaneseq
    %v523 = vshrl.u32 %v522, 7
    %v524 = vsub.s32 %v497, %v523
    %v525 = vrot.slane %v485, %v524
    %v526 = vlaneseq
    %v527 = vshrl.u32 %v526, 7
    %v528 = vsub.s32 %v497, %v527
    %v529 = vrot.slane %v487, %v528
    %vm530 = vcmask 1041409
    %v531 = vsel %vm530, %v505, %v501
    %vm532 = vcmask 1042434
    %v533 = vsel %vm532, %v509, %v531
    %vm534 = vcmask 1043459
    %v535 = vsel %vm534, %v513, %v533
    %vm536 = vcmask 1044484
    %v537 = vsel %vm536, %v517, %v535
    %vm538 = vcmask 1045509
    %v539 = vsel %vm538, %v521, %v537
    %vm540 = vcmask 1046534
    %v541 = vsel %vm540, %v525, %v539
    %vm542 = vcmask 1047559
    %v543 = vsel %vm542, %v529, %v541
    %vm545 = vcmask 64512
    %v546 = vsel %vm545, %v543, -inf
    %547 = vmax.xlane.f32.xlu0 %v546
    %v548 = vpop.xlane.xlu0 %547
    %v550 = vlaneseq
    %v551 = vshrl.u32 %v550, 7
    %v552 = vsub.s32 0, %v551
    %v553 = vrot.slane %v548, %v552
    %v554 = vlaneseq
    %v555 = vshrl.u32 %v554, 7
    %v556 = vsub.s32 1, %v555
    %v557 = vrot.slane %v548, %v556
    %v558 = vlaneseq
    %v559 = vshrl.u32 %v558, 7
    %v560 = vsub.s32 2, %v559
    %v561 = vrot.slane %v548, %v560
    %v562 = vlaneseq
    %v563 = vshrl.u32 %v562, 7
    %v564 = vsub.s32 3, %v563
    %v565 = vrot.slane %v548, %v564
    %v566 = vlaneseq
    %v567 = vshrl.u32 %v566, 7
    %v568 = vsub.s32 4, %v567
    %v569 = vrot.slane %v548, %v568
    %v570 = vlaneseq
    %v571 = vshrl.u32 %v570, 7
    %v572 = vsub.s32 5, %v571
    %v573 = vrot.slane %v548, %v572
    %v574 = vlaneseq
    %v575 = vshrl.u32 %v574, 7
    %v576 = vsub.s32 6, %v575
    %v577 = vrot.slane %v548, %v576
    %v578 = vlaneseq
    %v579 = vshrl.u32 %v578, 7
    %v580 = vsub.s32 7, %v579
    %v581 = vrot.slane %v548, %v580
    %v590 = vsub.f32 %v473, %v553
    %v591 = vsub.f32 %v475, %v557
    %v592 = vsub.f32 %v477, %v561
    %v593 = vsub.f32 %v479, %v565
    %v594 = vsub.f32 %v481, %v569
    %v595 = vsub.f32 %v483, %v573
    %v596 = vsub.f32 %v485, %v577
    %v597 = vsub.f32 %v487, %v581
    %v598 = vmul.f32 %v590, 1.442695
    %v599 = vpow.pop %v598
    %v600 = vmul.f32 %v591, 1.442695
    %v601 = vpow.pop %v600
    %v602 = vmul.f32 %v592, 1.442695
    %v603 = vpow.pop %v602
    %v604 = vmul.f32 %v593, 1.442695
    %v605 = vpow.pop %v604
    %v606 = vmul.f32 %v594, 1.442695
    %v607 = vpow.pop %v606
    %v608 = vmul.f32 %v595, 1.442695
    %v609 = vpow.pop %v608
    %v610 = vmul.f32 %v596, 1.442695
    %v611 = vpow.pop %v610
    %v612 = vmul.f32 %v597, 1.442695
    %v613 = vpow.pop %v612
    %622 = vset.pattern.permute.xlu0 0
    %623 = vperm.xlu0 %622, %v599
    %v624 = vpop.permute.xlu0 %623
    %625 = vset.pattern.permute.xlu0 0
    %626 = vperm.xlu0 %625, %v601
    %v627 = vpop.permute.xlu0 %626
    %628 = vset.pattern.permute.xlu0 0
    %629 = vperm.xlu0 %628, %v603
    %v630 = vpop.permute.xlu0 %629
    %631 = vset.pattern.permute.xlu0 0
    %632 = vperm.xlu0 %631, %v605
    %v633 = vpop.permute.xlu0 %632
    %634 = vset.pattern.permute.xlu0 0
    %635 = vperm.xlu0 %634, %v607
    %v636 = vpop.permute.xlu0 %635
    %637 = vset.pattern.permute.xlu0 0
    %638 = vperm.xlu0 %637, %v609
    %v639 = vpop.permute.xlu0 %638
    %640 = vset.pattern.permute.xlu0 0
    %641 = vperm.xlu0 %640, %v611
    %v642 = vpop.permute.xlu0 %641
    %643 = vset.pattern.permute.xlu0 0
    %644 = vperm.xlu0 %643, %v613
    %v645 = vpop.permute.xlu0 %644
    %v646 = vlaneseq
    %v647 = vshrl.u32 %v646, 7
    %v648 = vsub.s32 %v497, %v647
    %v649 = vrot.slane %v624, %v648
    %v650 = vlaneseq
    %v651 = vshrl.u32 %v650, 7
    %v652 = vsub.s32 %v497, %v651
    %v653 = vrot.slane %v627, %v652
    %v654 = vlaneseq
    %v655 = vshrl.u32 %v654, 7
    %v656 = vsub.s32 %v497, %v655
    %v657 = vrot.slane %v630, %v656
    %v658 = vlaneseq
    %v659 = vshrl.u32 %v658, 7
    %v660 = vsub.s32 %v497, %v659
    %v661 = vrot.slane %v633, %v660
    %v662 = vlaneseq
    %v663 = vshrl.u32 %v662, 7
    %v664 = vsub.s32 %v497, %v663
    %v665 = vrot.slane %v636, %v664
    %v666 = vlaneseq
    %v667 = vshrl.u32 %v666, 7
    %v668 = vsub.s32 %v497, %v667
    %v669 = vrot.slane %v639, %v668
    %v670 = vlaneseq
    %v671 = vshrl.u32 %v670, 7
    %v672 = vsub.s32 %v497, %v671
    %v673 = vrot.slane %v642, %v672
    %v674 = vlaneseq
    %v675 = vshrl.u32 %v674, 7
    %v676 = vsub.s32 %v497, %v675
    %v677 = vrot.slane %v645, %v676
    %v678 = vsel %vm530, %v653, %v649
    %v679 = vsel %vm532, %v657, %v678
    %v680 = vsel %vm534, %v661, %v679
    %v681 = vsel %vm536, %v665, %v680
    %v682 = vsel %vm538, %v669, %v681
    %v683 = vsel %vm540, %v673, %v682
    %v684 = vsel %vm542, %v677, %v683
    %v686 = vsel %vm545, %v684, 0.0
    %687 = vadd.xlane.f32.xlu0 %v686
    %v688 = vpop.xlane.xlu0 %687
    %v690 = vlaneseq
    %v691 = vshrl.u32 %v690, 7
    %v692 = vsub.s32 0, %v691
    %v693 = vrot.slane %v688, %v692
    %v694 = vlaneseq
    %v695 = vshrl.u32 %v694, 7
    %v696 = vsub.s32 1, %v695
    %v697 = vrot.slane %v688, %v696
    %v698 = vlaneseq
    %v699 = vshrl.u32 %v698, 7
    %v700 = vsub.s32 2, %v699
    %v701 = vrot.slane %v688, %v700
    %v702 = vlaneseq
    %v703 = vshrl.u32 %v702, 7
    %v704 = vsub.s32 3, %v703
    %v705 = vrot.slane %v688, %v704
    %v706 = vlaneseq
    %v707 = vshrl.u32 %v706, 7
    %v708 = vsub.s32 4, %v707
    %v709 = vrot.slane %v688, %v708
    %v710 = vlaneseq
    %v711 = vshrl.u32 %v710, 7
    %v712 = vsub.s32 5, %v711
    %v713 = vrot.slane %v688, %v712
    %v714 = vlaneseq
    %v715 = vshrl.u32 %v714, 7
    %v716 = vsub.s32 6, %v715
    %v717 = vrot.slane %v688, %v716
    %v718 = vlaneseq
    %v719 = vshrl.u32 %v718, 7
    %v720 = vsub.s32 7, %v719
    %v721 = vrot.slane %v688, %v720
    %v730 = vrcp.pop %v693
    %v731 = vmul.f32 %v599, %v730
    %v732 = vrcp.pop %v697
    %v733 = vmul.f32 %v601, %v732
    %v734 = vrcp.pop %v701
    %v735 = vmul.f32 %v603, %v734
    %v736 = vrcp.pop %v705
    %v737 = vmul.f32 %v605, %v736
    %v738 = vrcp.pop %v709
    %v739 = vmul.f32 %v607, %v738
    %v740 = vrcp.pop %v713
    %v741 = vmul.f32 %v609, %v740
    %v742 = vrcp.pop %v717
    %v743 = vmul.f32 %v611, %v742
    %v744 = vrcp.pop %v721
    %v745 = vmul.f32 %v613, %v744
    %754 = vset.pattern.permute.xlu0 0
    %755 = vperm.xlu0 %754, %v731
    %v756 = vpop.permute.xlu0 %755
    %757 = vset.pattern.permute.xlu0 0
    %758 = vperm.xlu0 %757, %v733
    %v759 = vpop.permute.xlu0 %758
    %760 = vset.pattern.permute.xlu0 0
    %761 = vperm.xlu0 %760, %v735
    %v762 = vpop.permute.xlu0 %761
    %763 = vset.pattern.permute.xlu0 0
    %764 = vperm.xlu0 %763, %v737
    %v765 = vpop.permute.xlu0 %764
    %766 = vset.pattern.permute.xlu0 0
    %767 = vperm.xlu0 %766, %v739
    %v768 = vpop.permute.xlu0 %767
    %769 = vset.pattern.permute.xlu0 0
    %770 = vperm.xlu0 %769, %v741
    %v771 = vpop.permute.xlu0 %770
    %772 = vset.pattern.permute.xlu0 0
    %773 = vperm.xlu0 %772, %v743
    %v774 = vpop.permute.xlu0 %773
    %775 = vset.pattern.permute.xlu0 0
    %776 = vperm.xlu0 %775, %v745
    %v777 = vpop.permute.xlu0 %776
    %v778 = vlaneseq
    %v779 = vshrl.u32 %v778, 7
    %v780 = vsub.s32 %v497, %v779
    %v781 = vrot.slane %v756, %v780
    %v782 = vlaneseq
    %v783 = vshrl.u32 %v782, 7
    %v784 = vsub.s32 %v497, %v783
    %v785 = vrot.slane %v759, %v784
    %v786 = vlaneseq
    %v787 = vshrl.u32 %v786, 7
    %v788 = vsub.s32 %v497, %v787
    %v789 = vrot.slane %v762, %v788
    %v790 = vlaneseq
    %v791 = vshrl.u32 %v790, 7
    %v792 = vsub.s32 %v497, %v791
    %v793 = vrot.slane %v765, %v792
    %v794 = vlaneseq
    %v795 = vshrl.u32 %v794, 7
    %v796 = vsub.s32 %v497, %v795
    %v797 = vrot.slane %v768, %v796
    %v798 = vlaneseq
    %v799 = vshrl.u32 %v798, 7
    %v800 = vsub.s32 %v497, %v799
    %v801 = vrot.slane %v771, %v800
    %v802 = vlaneseq
    %v803 = vshrl.u32 %v802, 7
    %v804 = vsub.s32 %v497, %v803
    %v805 = vrot.slane %v774, %v804
    %v806 = vlaneseq
    %v807 = vshrl.u32 %v806, 7
    %v808 = vsub.s32 %v497, %v807
    %v809 = vrot.slane %v777, %v808
    %v810 = vsel %vm530, %v785, %v781
    %v811 = vsel %vm532, %v789, %v810
    %v812 = vsel %vm534, %v793, %v811
    %v813 = vsel %vm536, %v797, %v812
    %v814 = vsel %vm538, %v801, %v813
    %v815 = vsel %vm540, %v805, %v814
    %v816 = vsel %vm542, %v809, %v815
    %818 = vst.msk [vmem:[#allocation10] sm:$0xff] %vm545, %v816
    // Predicated region
    $region42: #{tpu_custom_call.1} parent=1 // pred_check
      _
    $region43: #{tpu_custom_call.1} parent=1 // pred_check_branch
      %820 = sbr.rel (0) target = $region45
    $region44: #{tpu_custom_call.1} parent=1 // pred_region
      %s822 = ssub.s32 128, 128
      %823 = vsyncadd [#allocation4], %s822
      %s825 = sshll.u32 [#allocation10], 4
      %s826 = int_to_ptr.vmem [resolvable:$true] %s825
      %828 = dma.vmem_to_hbm [thread:$0]  %s826, 128, %s6, [#allocation4]
    $region45: #{tpu_custom_call.1} parent=1 // pred_fallthru
      _
    // Predicated region
    $region46: #{tpu_custom_call.1} parent=1 // pred_check
      _
    $region47: #{tpu_custom_call.1} parent=1 // pred_check_branch
      %830 = sbr.rel (0) target = $region49
    $region48: #{tpu_custom_call.1} parent=1 // pred_region
      %831 = dma.done [#allocation4], 128
    $region49: #{tpu_custom_call.1} parent=1 // pred_fallthru
      _
    %832 = vsyncpa [#allocation3], 1
    %833 = vsyncpa [#allocation6], 1
    %834 = vsyncpa [#allocation9], 1
    %835 = vsyncpa [#allocation4], 1

</llo_original>
